<compile_context>
chip_gen: v5e
topology: v5e:2x2
jax: 0.10.0
libtpu: 0.0.40
codegen_flags: <defaults>
</compile_context>

<pallas_src>
import jax
import jax.numpy as jnp
from jax.experimental import pallas as pl
from jax.experimental.pallas import tpu as pltpu

NUM_KNOTS = 10
DEGREE = 3
N_BASIS = NUM_KNOTS - DEGREE - 1      # 6 valid cubic basis functions (scipy)
N_PIECES = N_BASIS - DEGREE           # 3 polynomial pieces on the base interval


def kan_kernel(knots_ref, x_ref, w_ref, b_ref, poly_ref, o_ref):
    # ---- Linear layer on the MXU (lane-dense / lane-packed output cols) ----
    y = jnp.dot(x_ref[...], w_ref[...], preferred_element_type=jnp.float32)
    y = y + b_ref[...]                                    # (tm, tn) + (1, tn)

    # ---- Piece selection ---------------------------------------------------
    # Piece p covers [t[deg+p], t[deg+p+1]); the edge pieces extrapolate,
    # matching scipy BSpline(extrapolate=True) (== clipping ell to [deg, n-1]).
    masks = [y >= knots_ref[DEGREE + p] for p in range(1, N_PIECES)]

    def coef(k):
        c = poly_ref[k, :]
        for p in range(1, N_PIECES):
            c = jnp.where(masks[p - 1], poly_ref[p * 4 + k, :], c)
        return c

    # ---- Horner cubic:  c0 + y*(c1 + y*(c2 + y*c3)) ------------------------
    acc = coef(3)
    acc = acc * y + coef(2)
    acc = acc * y + coef(1)
    acc = acc * y + coef(0)
    o_ref[...] = acc.astype(o_ref.dtype)


def _piece_poly_coeffs(knots, coeffs):
    """Power-basis coefficients of the spline on each base-interval piece.

    Returns (N_PIECES * 4, D_out): row p*4 + k is the coefficient of y**k of
    sum_i coeffs[i, :] * B_{i,3}(y) restricted (and extrapolated) to piece p.
    Pure scalar work, runs once in the wrapper (XLA), lands in VMEM.
    """
    deg, n = DEGREE, N_BASIS
    t = knots.astype(jnp.float32)
    c = coeffs[:n].astype(jnp.float32)

    def lin_mul(p, alpha, beta):   # (alpha + beta*y) * p(y), deg(p) <= 2
        return (alpha * p[0],
                alpha * p[1] + beta * p[0],
                alpha * p[2] + beta * p[1],
                alpha * p[3] + beta * p[2])

    def padd(a, b):
        return tuple(u + v for u, v in zip(a, b))

    rows = []
    for piece in range(N_PIECES):
        ell = deg + piece
        # Trimmed Cox-de Boor with polynomial (power-basis) arithmetic.
        prev = {i: ((jnp.float32(1.0) if i == ell else jnp.float32(0.0)),
                    jnp.float32(0.0), jnp.float32(0.0), jnp.float32(0.0))
                for i in range(deg, n)}
        for d in range(1, deg + 1):
            cur = {}
            for i in range(max(0, deg - d), n):
                dl = t[i + d] - t[i]
                dr = t[i + d + 1] - t[i + 1]
                inv_l = jnp.where(dl != 0, 1.0 / dl, 0.0)   # 0/0 -> 0 (scipy)
                inv_r = jnp.where(dr != 0, 1.0 / dr, 0.0)
                term = (jnp.float32(0.0),) * 4
                if i in prev:
                    term = padd(term, lin_mul(prev[i], -t[i] * inv_l, inv_l))
                if (i + 1) in prev:
                    term = padd(term,
                                lin_mul(prev[i + 1], t[i + d + 1] * inv_r, -inv_r))
                cur[i] = term
            prev = cur
        for k in range(4):
            basis_k = jnp.stack([prev[i][k] for i in range(n)])   # (n,)
            rows.append(basis_k @ c)                              # (D_out,)
    return jnp.stack(rows)                                        # (12, D_out)


def kan_layer(x, w, b, knots, coeffs, *, tm=None, tn=None):
    """x: (B, D_in), w: (D_in, D_out), b: (D_out,), knots: (10,), coeffs: (10, D_out)."""
    B, D_in = x.shape
    D_out = w.shape[1]

    # ---- Lane packing: fold G batch rows into the lane dim when D_out < 128.
    if D_out < 128 and 128 % D_out == 0:
        G = 128 // D_out
    else:
        G = 1

    K = G * D_in
    D_pack = G * D_out
    D_pad = pl.cdiv(D_pack, 128) * 128          # lane-dense output columns

    # ---- Effective (packed) operands ---------------------------------------
    if G > 1:
        w_eff = jnp.kron(jnp.eye(G, dtype=jnp.float32), w.astype(jnp.float32))
        b_eff = jnp.tile(b.astype(jnp.float32), G)
    else:
        w_eff = w.astype(jnp.float32)
        b_eff = b.astype(jnp.float32)
    poly = _piece_poly_coeffs(knots, coeffs)                     # (12, D_out)
    poly_eff = jnp.tile(poly, (1, G)) if G > 1 else poly

    w_p = jnp.pad(w_eff, ((0, 0), (0, D_pad - D_pack)))
    b_p = jnp.pad(b_eff.reshape(1, D_pack), ((0, 0), (0, D_pad - D_pack)))
    poly_p = jnp.pad(poly_eff, ((0, 0), (0, D_pad - D_pack)))

    # ---- Tile sizes ---------------------------------------------------------
    B_rows = pl.cdiv(B, G)                      # packed batch rows needed
    if tm is None:
        # Aim for >= 2 row tiles (keeps both v7x TensorCores busy), cap at 256,
        # round to the 8-sublane granule.  Temp footprint stays a few MiB.
        half = pl.cdiv(B_rows, 2)
        tm = min(256, max(8, pl.cdiv(half, 8) * 8))
    if tn is None:
        tn = min(512, D_pad)

    B_rows_pad = pl.cdiv(B_rows, tm) * tm
    B_pad = B_rows_pad * G

    x_p = jnp.pad(x.astype(jnp.float32), ((0, B_pad - B), (0, 0)))
    x_p = x_p.reshape(B_rows_pad, K)            # row-major pack; no-op if G == 1

    out = pl.pallas_call(
        kan_kernel,
        out_shape=jax.ShapeDtypeStruct((B_rows_pad, D_pad), jnp.float32),
        grid=(B_rows_pad // tm, D_pad // tn),
        in_specs=[
            pl.BlockSpec(memory_space=pltpu.MemorySpace.SMEM),      # knots (10,)
            pl.BlockSpec((tm, K), lambda i, j: (i, 0)),             # x  (row tiles)
            pl.BlockSpec((K, tn), lambda i, j: (0, j)),             # W  (col tiles)
            pl.BlockSpec((1, tn), lambda i, j: (0, j)),             # bias
            pl.BlockSpec((N_PIECES * 4, tn), lambda i, j: (0, j)),  # piece polys
        ],
        out_specs=pl.BlockSpec((tm, tn), lambda i, j: (i, j)),
        compiler_params=pltpu.CompilerParams(
            dimension_semantics=("parallel", "parallel")),
    )(knots.astype(jnp.float32), x_p, w_p, b_p, poly_p)

    out = out[:, :D_pack].reshape(B_pad, D_out)   # unpack lanes -> batch rows
    return out[:B]


def kan_reference(x, w, b, knots, coeffs):
    """Pure-JAX reference (full untrimmed Cox-de Boor recursion with divides)."""
    y = x @ w + b[None, :]
    K, deg = NUM_KNOTS, DEGREE
    n = K - deg - 1
    t = knots
    ell = jnp.full(y.shape, deg, dtype=jnp.int32)
    for m in range(deg + 1, n):
        ell = ell + (y >= t[m]).astype(jnp.int32)
    basis = [(ell == i).astype(jnp.float32) for i in range(K - 1)]
    for d in range(1, deg + 1):
        nb = []
        for i in range(K - d - 1):
            nb.append((y - t[i]) / (t[i + d] - t[i]) * basis[i]
                      + (t[i + d + 1] - y) / (t[i + d + 1] - t[i + 1]) * basis[i + 1])
        basis = nb
    out = jnp.zeros_like(y)
    for i in range(n):
        out = out + basis[i] * coeffs[i][None, :]
    return out


if __name__ == "__main__":
    # Small shapes consistent with KANLayer(input_dim=32, output_dim=16).
    batch, input_dim, output_dim = 8, 32, 16

    key = jax.random.PRNGKey(0)
    kx, kw, kb, kc = jax.random.split(key, 4)

    x = jax.random.normal(kx, (batch, input_dim), dtype=jnp.float32) * 0.1
    # nn.Linear(input_dim, output_dim): weight (out, in) -> stored transposed.
    w = jax.random.normal(kw, (input_dim, output_dim), dtype=jnp.float32) * 0.1
    b = jax.random.normal(kb, (output_dim,), dtype=jnp.float32) * 0.1
    # SplineActivation params: knots = linspace(0,1,10), coeffs (10, output_dim)
    knots = jnp.linspace(0.0, 1.0, NUM_KNOTS).astype(jnp.float32)
    coeffs = jax.random.normal(kc, (NUM_KNOTS, output_dim), dtype=jnp.float32)

    out = kan_layer(x, w, b, knots, coeffs)
    out = jax.block_until_ready(out)

    ref = kan_reference(x, w, b, knots, coeffs)
    assert out.shape == (batch, output_dim)
    assert jnp.allclose(out, ref, atol=1e-4, rtol=1e-4), "mismatch vs reference"

    print("KERNEL_OK")
</pallas_src>

<mosaic_0001>
module attributes {stable_mosaic.version = 11 : i64} {
  func.func @kan_kernel(%arg0: i32, %arg1: i32, %arg2: memref<10xf32, #tpu.memory_space<smem>>, %arg3: memref<8x256xf32, #tpu.memory_space<vmem>>, %arg4: memref<256x128xf32, #tpu.memory_space<vmem>>, %arg5: memref<1x128xf32, #tpu.memory_space<vmem>>, %arg6: memref<12x128xf32, #tpu.memory_space<vmem>>, %arg7: memref<8x128xf32, #tpu.memory_space<vmem>>) attributes {dimension_semantics = [#tpu.dimension_semantics<parallel>, #tpu.dimension_semantics<parallel>], iteration_bounds = array<i64: 1, 1>, scalar_prefetch = 0 : i64, scratch_operands = 0 : i64, tpu.core_type = #tpu.core_type<tc>, window_params = [{transform_indices = @transform_0, window_bounds = array<i64: 10>}, {transform_indices = @transform_1, window_bounds = array<i64: 8, 256>}, {transform_indices = @transform_2, window_bounds = array<i64: 256, 128>}, {transform_indices = @transform_3, window_bounds = array<i64: 1, 128>}, {transform_indices = @transform_4, window_bounds = array<i64: 12, 128>}, {transform_indices = @transform_5, window_bounds = array<i64: 8, 128>}]} {
    %c0 = arith.constant 0 : index
    %c0_0 = arith.constant 0 : index
    %0 = vector.load %arg3[%c0, %c0_0] : memref<8x256xf32, #tpu.memory_space<vmem>>, vector<8x256xf32>
    %c0_1 = arith.constant 0 : index
    %c0_2 = arith.constant 0 : index
    %1 = vector.load %arg4[%c0_1, %c0_2] : memref<256x128xf32, #tpu.memory_space<vmem>>, vector<256x128xf32>
    %cst = arith.constant dense<0.000000e+00> : vector<8x128xf32>
    %2 = tpu.matmul %0, %1, %cst {dimension_numbers = #tpu.dot_dimension_numbers<[1], [0], [0], [1], [0, 0, 1, 1], [], []>} : vector<8x256xf32>, vector<256x128xf32>, vector<8x128xf32> -> vector<8x128xf32>
    %c0_3 = arith.constant 0 : index
    %c0_4 = arith.constant 0 : index
    %3 = vector.load %arg5[%c0_3, %c0_4] : memref<1x128xf32, #tpu.memory_space<vmem>>, vector<1x128xf32>
    %4 = vector.broadcast %3 : vector<1x128xf32> to vector<8x128xf32>
    %5 = arith.addf %2, %4 : vector<8x128xf32>
    %c4 = arith.constant 4 : index
    %6 = memref.load %arg2[%c4] : memref<10xf32, #tpu.memory_space<smem>>
    %7 = vector.broadcast %6 : f32 to vector<8x128xf32>
    %8 = arith.cmpf oge, %5, %7 : vector<8x128xf32>
    %c5 = arith.constant 5 : index
    %9 = memref.load %arg2[%c5] : memref<10xf32, #tpu.memory_space<smem>>
    %10 = vector.broadcast %9 : f32 to vector<8x128xf32>
    %11 = arith.cmpf oge, %5, %10 : vector<8x128xf32>
    %c3 = arith.constant 3 : index
    %c0_5 = arith.constant 0 : index
    %12 = vector.load %arg6[%c3, %c0_5] : memref<12x128xf32, #tpu.memory_space<vmem>>, vector<1x128xf32>
    %13 = vector.shape_cast %12 : vector<1x128xf32> to vector<128xf32>
    %c7 = arith.constant 7 : index
    %c0_6 = arith.constant 0 : index
    %14 = vector.load %arg6[%c7, %c0_6] : memref<12x128xf32, #tpu.memory_space<vmem>>, vector<1x128xf32>
    %15 = vector.shape_cast %14 : vector<1x128xf32> to vector<128xf32>
    %16 = vector.shape_cast %15 : vector<128xf32> to vector<1x128xf32>
    %17 = vector.broadcast %16 : vector<1x128xf32> to vector<8x128xf32>
    %18 = vector.shape_cast %13 : vector<128xf32> to vector<1x128xf32>
    %19 = vector.broadcast %18 : vector<1x128xf32> to vector<8x128xf32>
    %20 = arith.select %8, %17, %19 : vector<8x128xi1>, vector<8x128xf32>
    %c11 = arith.constant 11 : index
    %c0_7 = arith.constant 0 : index
    %21 = vector.load %arg6[%c11, %c0_7] : memref<12x128xf32, #tpu.memory_space<vmem>>, vector<1x128xf32>
    %22 = vector.shape_cast %21 : vector<1x128xf32> to vector<128xf32>
    %23 = vector.shape_cast %22 : vector<128xf32> to vector<1x128xf32>
    %24 = vector.broadcast %23 : vector<1x128xf32> to vector<8x128xf32>
    %25 = arith.select %11, %24, %20 : vector<8x128xi1>, vector<8x128xf32>
    %26 = arith.mulf %25, %5 : vector<8x128xf32>
    %c2 = arith.constant 2 : index
    %c0_8 = arith.constant 0 : index
    %27 = vector.load %arg6[%c2, %c0_8] : memref<12x128xf32, #tpu.memory_space<vmem>>, vector<1x128xf32>
    %28 = vector.shape_cast %27 : vector<1x128xf32> to vector<128xf32>
    %c6 = arith.constant 6 : index
    %c0_9 = arith.constant 0 : index
    %29 = vector.load %arg6[%c6, %c0_9] : memref<12x128xf32, #tpu.memory_space<vmem>>, vector<1x128xf32>
    %30 = vector.shape_cast %29 : vector<1x128xf32> to vector<128xf32>
    %31 = vector.shape_cast %30 : vector<128xf32> to vector<1x128xf32>
    %32 = vector.broadcast %31 : vector<1x128xf32> to vector<8x128xf32>
    %33 = vector.shape_cast %28 : vector<128xf32> to vector<1x128xf32>
    %34 = vector.broadcast %33 : vector<1x128xf32> to vector<8x128xf32>
    %35 = arith.select %8, %32, %34 : vector<8x128xi1>, vector<8x128xf32>
    %c10 = arith.constant 10 : index
    %c0_10 = arith.constant 0 : index
    %36 = vector.load %arg6[%c10, %c0_10] : memref<12x128xf32, #tpu.memory_space<vmem>>, vector<1x128xf32>
    %37 = vector.shape_cast %36 : vector<1x128xf32> to vector<128xf32>
    %38 = vector.shape_cast %37 : vector<128xf32> to vector<1x128xf32>
    %39 = vector.broadcast %38 : vector<1x128xf32> to vector<8x128xf32>
    %40 = arith.select %11, %39, %35 : vector<8x128xi1>, vector<8x128xf32>
    %41 = arith.addf %26, %40 : vector<8x128xf32>
    %42 = arith.mulf %41, %5 : vector<8x128xf32>
    %c1 = arith.constant 1 : index
    %c0_11 = arith.constant 0 : index
    %43 = vector.load %arg6[%c1, %c0_11] : memref<12x128xf32, #tpu.memory_space<vmem>>, vector<1x128xf32>
    %44 = vector.shape_cast %43 : vector<1x128xf32> to vector<128xf32>
    %c5_12 = arith.constant 5 : index
    %c0_13 = arith.constant 0 : index
    %45 = vector.load %arg6[%c5_12, %c0_13] : memref<12x128xf32, #tpu.memory_space<vmem>>, vector<1x128xf32>
    %46 = vector.shape_cast %45 : vector<1x128xf32> to vector<128xf32>
    %47 = vector.shape_cast %46 : vector<128xf32> to vector<1x128xf32>
    %48 = vector.broadcast %47 : vector<1x128xf32> to vector<8x128xf32>
    %49 = vector.shape_cast %44 : vector<128xf32> to vector<1x128xf32>
    %50 = vector.broadcast %49 : vector<1x128xf32> to vector<8x128xf32>
    %51 = arith.select %8, %48, %50 : vector<8x128xi1>, vector<8x128xf32>
    %c9 = arith.constant 9 : index
    %c0_14 = arith.constant 0 : index
    %52 = vector.load %arg6[%c9, %c0_14] : memref<12x128xf32, #tpu.memory_space<vmem>>, vector<1x128xf32>
    %53 = vector.shape_cast %52 : vector<1x128xf32> to vector<128xf32>
    %54 = vector.shape_cast %53 : vector<128xf32> to vector<1x128xf32>
    %55 = vector.broadcast %54 : vector<1x128xf32> to vector<8x128xf32>
    %56 = arith.select %11, %55, %51 : vector<8x128xi1>, vector<8x128xf32>
    %57 = arith.addf %42, %56 : vector<8x128xf32>
    %58 = arith.mulf %57, %5 : vector<8x128xf32>
    %c0_15 = arith.constant 0 : index
    %c0_16 = arith.constant 0 : index
    %59 = vector.load %arg6[%c0_15, %c0_16] : memref<12x128xf32, #tpu.memory_space<vmem>>, vector<1x128xf32>
    %60 = vector.shape_cast %59 : vector<1x128xf32> to vector<128xf32>
    %c4_17 = arith.constant 4 : index
    %c0_18 = arith.constant 0 : index
    %61 = vector.load %arg6[%c4_17, %c0_18] : memref<12x128xf32, #tpu.memory_space<vmem>>, vector<1x128xf32>
    %62 = vector.shape_cast %61 : vector<1x128xf32> to vector<128xf32>
    %63 = vector.shape_cast %62 : vector<128xf32> to vector<1x128xf32>
    %64 = vector.broadcast %63 : vector<1x128xf32> to vector<8x128xf32>
    %65 = vector.shape_cast %60 : vector<128xf32> to vector<1x128xf32>
    %66 = vector.broadcast %65 : vector<1x128xf32> to vector<8x128xf32>
    %67 = arith.select %8, %64, %66 : vector<8x128xi1>, vector<8x128xf32>
    %c8 = arith.constant 8 : index
    %c0_19 = arith.constant 0 : index
    %68 = vector.load %arg6[%c8, %c0_19] : memref<12x128xf32, #tpu.memory_space<vmem>>, vector<1x128xf32>
    %69 = vector.shape_cast %68 : vector<1x128xf32> to vector<128xf32>
    %70 = vector.shape_cast %69 : vector<128xf32> to vector<1x128xf32>
    %71 = vector.broadcast %70 : vector<1x128xf32> to vector<8x128xf32>
    %72 = arith.select %11, %71, %67 : vector<8x128xi1>, vector<8x128xf32>
    %73 = arith.addf %58, %72 : vector<8x128xf32>
    %c0_20 = arith.constant 0 : index
    %c0_21 = arith.constant 0 : index
    %74 = vector.load %arg7[%c0_20, %c0_21] : memref<8x128xf32, #tpu.memory_space<vmem>>, vector<8x128xf32>
    tpu.vector_store %arg7[%c0_20, %c0_21], %73 {strides = array<i32>} : memref<8x128xf32, #tpu.memory_space<vmem>>, vector<8x128xf32>,
    return
  }
  func.func @transform_0(%arg0: i32, %arg1: i32) -> i32 {
    %c0_i32 = arith.constant 0 : i32
    %c0_i32_0 = arith.constant 0 : i32
    return %c0_i32 : i32
  }
  func.func @transform_1(%arg0: i32, %arg1: i32) -> (i32, i32) {
    %c0_i32 = arith.constant 0 : i32
    %c0_i32_0 = arith.constant 0 : i32
    return %arg0, %c0_i32 : i32, i32
  }
  func.func @transform_2(%arg0: i32, %arg1: i32) -> (i32, i32) {
    %c0_i32 = arith.constant 0 : i32
    %c0_i32_0 = arith.constant 0 : i32
    return %c0_i32, %arg1 : i32, i32
  }
  func.func @transform_3(%arg0: i32, %arg1: i32) -> (i32, i32) {
    %c0_i32 = arith.constant 0 : i32
    %c0_i32_0 = arith.constant 0 : i32
    return %c0_i32, %arg1 : i32, i32
  }
  func.func @transform_4(%arg0: i32, %arg1: i32) -> (i32, i32) {
    %c0_i32 = arith.constant 0 : i32
    %c0_i32_0 = arith.constant 0 : i32
    return %c0_i32, %arg1 : i32, i32
  }
  func.func @transform_5(%arg0: i32, %arg1: i32) -> (i32, i32) {
    %c0_i32 = arith.constant 0 : i32
    return %arg0, %arg1 : i32, i32
  }
}

</mosaic_0001>

<llo_original>
// kernel: tpu_custom_call.1
$region0: #{tpu_custom_call.1}
  #allocation0 [shape = 'u32[]', space=smem, size = 0x4, offset = 0x4, fixed_abs, tag = 'smem constant byte address 0x4 - core index']
  #allocation1 [shape = 'u32[72,128]{1,0:T(1,128)}', space=vmem, size = 0x9000, scoped, tag = 'internal scratch']
  %s0 = inlined_call_operand.hbm [shape: f32[10], index: 0, kind: input, shape index: {}]
  %s1 = inlined_call_operand.hbm [shape: f32[8,256], index: 1, kind: input, shape index: {}]
  %s2 = inlined_call_operand.hbm [shape: f32[256,128], index: 2, kind: input, shape index: {}]
  %s3 = inlined_call_operand.vmem [shape: f32[1,128], index: 3, kind: input, shape index: {}]
  %s4 = inlined_call_operand.hbm [shape: f32[12,128], index: 4, kind: input, shape index: {}]
  %s5 = inlined_call_operand.hbm [shape: f32[8,128], index: 5, kind: output, shape index: {}]
  %s6 = sld [smem:[#allocation0]]
  $region46: #{tpu_custom_call.1} parent=0
    _
  %s8 = ssub.s32 1, %s6
  %s9 = scalar_select 0, %s8, %s6
  $region1: #{tpu_custom_call.1} parent=0
    #allocation2 [shape = 'u8[512]{0}', space=smem, size = 0x200, scoped, tag = 'input window, operand 0, single buffered']
    #allocation3 [shape = 's32[1]{0}', space=sflag, size = 0x4, scoped, tag = 'scoped memory for tpu_custom_call.1']
    #allocation4 [shape = 's32[1]{0}', space=sflag, size = 0x4, scoped, tag = 'scoped memory for tpu_custom_call.1']
    #allocation5 [shape = 's32[1]{0}', space=sflag, size = 0x4, scoped, tag = 'scoped memory for tpu_custom_call.1']
    #allocation6 [shape = 'u8[8192]{0}', space=vmem, size = 0x2000, scoped, tag = 'input window, operand 1, single buffered']
    #allocation7 [shape = 'u8[131072]{0}', space=vmem, size = 0x20000, scoped, tag = 'input window, operand 2, single buffered']
    #allocation8 [shape = 's32[1]{0}', space=sflag, size = 0x4, scoped, tag = 'scoped memory for tpu_custom_call.1']
    #allocation9 [shape = 'u8[8192]{0}', space=vmem, size = 0x2000, scoped, tag = 'input window, operand 4, single buffered']
    #allocation10 [shape = 'u8[4096]{0}', space=vmem, size = 0x1000, scoped, tag = 'output window, operand 0, single buffered']
    %10 = vsyncpa [#allocation5], 0
    %11 = vsyncpa [#allocation3], 0
    %12 = vsyncpa [#allocation8], 0
    %13 = vsyncpa [#allocation4], 0
    // Predicated region
    $region2: #{tpu_custom_call.1} parent=1 // pred_check
      _
    $region3: #{tpu_custom_call.1} parent=1 // pred_check_branch
      %15 = sbr.rel (0) target = $region5
    $region4: #{tpu_custom_call.1} parent=1 // pred_region
      %17 = vsyncadd [#allocation5], 0
      %s19 = sshll.u32 %s0, 4
      %s20 = int_to_ptr.hbm [resolvable:$true] %s19
      %22 = dma.hbm_to_smem %s20, 16, [#allocation2], [#allocation5]
    $region5: #{tpu_custom_call.1} parent=1 // pred_fallthru
      _
    // Predicated region
    $region6: #{tpu_custom_call.1} parent=1 // pred_check
      _
    $region7: #{tpu_custom_call.1} parent=1 // pred_check_branch
      %24 = sbr.rel (0) target = $region9
    $region8: #{tpu_custom_call.1} parent=1 // pred_region
      %26 = vsyncadd [#allocation3], 0
      %s28 = sshll.u32 %s1, 4
      %s29 = int_to_ptr.hbm [resolvable:$true] %s28
      %s30 = sshll.u32 [#allocation6], 4
      %s31 = int_to_ptr.vmem [resolvable:$true] %s30
      %33 = dma.hbm_to_vmem [thread:$0]  %s29, 256, %s31, [#allocation3]
    $region9: #{tpu_custom_call.1} parent=1 // pred_fallthru
      _
    // Predicated region
    $region10: #{tpu_custom_call.1} parent=1 // pred_check
      _
    $region11: #{tpu_custom_call.1} parent=1 // pred_check_branch
      %35 = sbr.rel (0) target = $region13
    $region12: #{tpu_custom_call.1} parent=1 // pred_region
      %37 = vsyncadd [#allocation8], 0
      %s38 = sshll.u32 %s2, 4
      %s39 = int_to_ptr.hbm [resolvable:$true] %s38
      %s40 = sshll.u32 [#allocation7], 4
      %s41 = int_to_ptr.vmem [resolvable:$true] %s40
      %46 = dma.hbm_to_vmem [thread:$0]  %s39, 4096, %s41, [#allocation8], 128, 128, 8
    $region13: #{tpu_custom_call.1} parent=1 // pred_fallthru
      _
    // Predicated region
    $region14: #{tpu_custom_call.1} parent=1 // pred_check
      _
    $region15: #{tpu_custom_call.1} parent=1 // pred_check_branch
      %48 = sbr.rel (0) target = $region17
    $region16: #{tpu_custom_call.1} parent=1 // pred_region
      _
    $region17: #{tpu_custom_call.1} parent=1 // pred_fallthru
      _
    // Predicated region
    $region18: #{tpu_custom_call.1} parent=1 // pred_check
      _
    $region19: #{tpu_custom_call.1} parent=1 // pred_check_branch
      %50 = sbr.rel (0) target = $region21
    $region20: #{tpu_custom_call.1} parent=1 // pred_region
      %52 = vsyncadd [#allocation8], 0
      %s53 = sshll.u32 %s4, 4
      %s54 = int_to_ptr.hbm [resolvable:$true] %s53
      %s55 = sshll.u32 [#allocation9], 4
      %s56 = int_to_ptr.vmem [resolvable:$true] %s55
      %61 = dma.hbm_to_vmem [thread:$0]  %s54, 256, %s56, [#allocation8], 128, 128, 8
    $region21: #{tpu_custom_call.1} parent=1 // pred_fallthru
      _
    // Predicated region
    $region22: #{tpu_custom_call.1} parent=1 // pred_check
      _
    $region23: #{tpu_custom_call.1} parent=1 // pred_check_branch
      %63 = sbr.rel (0) target = $region25
    $region24: #{tpu_custom_call.1} parent=1 // pred_region
      %65 = dma.done [#allocation5], 16
    $region25: #{tpu_custom_call.1} parent=1 // pred_fallthru
      _
    // Predicated region
    $region26: #{tpu_custom_call.1} parent=1 // pred_check
      _
    $region27: #{tpu_custom_call.1} parent=1 // pred_check_branch
      %67 = sbr.rel (0) target = $region29
    $region28: #{tpu_custom_call.1} parent=1 // pred_region
      %69 = dma.done [#allocation3], 256
    $region29: #{tpu_custom_call.1} parent=1 // pred_fallthru
      _
    // Predicated region
    $region30: #{tpu_custom_call.1} parent=1 // pred_check
      _
    $region31: #{tpu_custom_call.1} parent=1 // pred_check_branch
      %71 = sbr.rel (0) target = $region33
    $region32: #{tpu_custom_call.1} parent=1 // pred_region
      %73 = dma.done [#allocation8], 4096
    $region33: #{tpu_custom_call.1} parent=1 // pred_fallthru
      _
    // Predicated region
    $region34: #{tpu_custom_call.1} parent=1 // pred_check
      _
    $region35: #{tpu_custom_call.1} parent=1 // pred_check_branch
      %75 = sbr.rel (0) target = $region37
    $region36: #{tpu_custom_call.1} parent=1 // pred_region
      %77 = dma.done [#allocation8], 256
    $region37: #{tpu_custom_call.1} parent=1 // pred_fallthru
      _
    %78 = sfence
    %v79 = vld [vmem:[#allocation6] sm:$0xff]
    %v80 = vld [vmem:[#allocation6 + $0x8] sm:$0xff]
    %v81 = vld [vmem:[#allocation7] sm:$0xff]
    %v82 = vld [vmem:[#allocation7 + $0x8] sm:$0xff]
    %v83 = vld [vmem:[#allocation7 + $0x10] sm:$0xff]
    %v84 = vld [vmem:[#allocation7 + $0x18] sm:$0xff]
    %v85 = vld [vmem:[#allocation7 + $0x20] sm:$0xff]
    %v86 = vld [vmem:[#allocation7 + $0x28] sm:$0xff]
    %v87 = vld [vmem:[#allocation7 + $0x30] sm:$0xff]
    %v88 = vld [vmem:[#allocation7 + $0x38] sm:$0xff]
    %v89 = vld [vmem:[#allocation7 + $0x40] sm:$0xff]
    %v90 = vld [vmem:[#allocation7 + $0x48] sm:$0xff]
    %v91 = vld [vmem:[#allocation7 + $0x50] sm:$0xff]
    %v92 = vld [vmem:[#allocation7 + $0x58] sm:$0xff]
    %v93 = vld [vmem:[#allocation7 + $0x60] sm:$0xff]
    %v94 = vld [vmem:[#allocation7 + $0x68] sm:$0xff]
    %v95 = vld [vmem:[#allocation7 + $0x70] sm:$0xff]
    %v96 = vld [vmem:[#allocation7 + $0x78] sm:$0xff]
    %v97 = vld [vmem:[#allocation7 + $0x80] sm:$0xff]
    %v98 = vld [vmem:[#allocation7 + $0x88] sm:$0xff]
    %v99 = vld [vmem:[#allocation7 + $0x90] sm:$0xff]
    %v100 = vld [vmem:[#allocation7 + $0x98] sm:$0xff]
    %v101 = vld [vmem:[#allocation7 + $0xa0] sm:$0xff]
    %v102 = vld [vmem:[#allocation7 + $0xa8] sm:$0xff]
    %v103 = vld [vmem:[#allocation7 + $0xb0] sm:$0xff]
    %v104 = vld [vmem:[#allocation7 + $0xb8] sm:$0xff]
    %v105 = vld [vmem:[#allocation7 + $0xc0] sm:$0xff]
    %v106 = vld [vmem:[#allocation7 + $0xc8] sm:$0xff]
    %v107 = vld [vmem:[#allocation7 + $0xd0] sm:$0xff]
    %v108 = vld [vmem:[#allocation7 + $0xd8] sm:$0xff]
    %v109 = vld [vmem:[#allocation7 + $0xe0] sm:$0xff]
    %v110 = vld [vmem:[#allocation7 + $0xe8] sm:$0xff]
    %v111 = vld [vmem:[#allocation7 + $0xf0] sm:$0xff]
    %v112 = vld [vmem:[#allocation7 + $0xf8] sm:$0xff]
    %v113 = vld [vmem:[%s3] sm:$0x1]
    %v115 = vperm.slane %v113, 0
    %117 = vmatpush.msra.mxu0 %v96
    %118 = vmatpush.msra.mxu0 %v95
    %119 = vmatpush.msra.mxu0 %v94
    %120 = vmatpush.msra.mxu0 %v93
    %121 = vmatpush.msra.mxu0 %v92
    %122 = vmatpush.msra.mxu0 %v91
    %123 = vmatpush.msra.mxu0 %v90
    %124 = vmatpush.msra.mxu0 %v89
    %125 = vmatpush.msra.mxu0 %v88
    %126 = vmatpush.msra.mxu0 %v87
    %127 = vmatpush.msra.mxu0 %v86
    %128 = vmatpush.msra.mxu0 %v85
    %129 = vmatpush.msra.mxu0 %v84
    %130 = vmatpush.msra.mxu0 %v83
    %131 = vmatpush.msra.mxu0 %v82
    %132 = vmatpush.msra.mxu0 %v81
    %133 = vmatmul.f32.gmra.mxu0 %v79
    %v134 = vpop.f32.mrf.mxu0
    %v135 = vadd.f32 %v115, %v134
    %136 = vdwg.mxu0
    %137 = vmatpush.msra.mxu0 %v112
    %138 = vmatpush.msra.mxu0 %v111
    %139 = vmatpush.msra.mxu0 %v110
    %140 = vmatpush.msra.mxu0 %v109
    %141 = vmatpush.msra.mxu0 %v108
    %142 = vmatpush.msra.mxu0 %v107
    %143 = vmatpush.msra.mxu0 %v106
    %144 = vmatpush.msra.mxu0 %v105
    %145 = vmatpush.msra.mxu0 %v104
    %146 = vmatpush.msra.mxu0 %v103
    %147 = vmatpush.msra.mxu0 %v102
    %148 = vmatpush.msra.mxu0 %v101
    %149 = vmatpush.msra.mxu0 %v100
    %150 = vmatpush.msra.mxu0 %v99
    %151 = vmatpush.msra.mxu0 %v98
    %152 = vmatpush.msra.mxu0 %v97
    %153 = vmatmul.f32.gmra.mxu0 %v80
    %v154 = vpop.f32.mrf.mxu0
    %v155 = vadd.f32 %v135, %v154
    %156 = vdwg.mxu0
    %s157 = sld [smem:[#allocation2 + $0x4]]
    %v158 = vstv %s157
    %vm159 = vcmp.ge.f32.partialorder %v155, %v158
    %s160 = sld [smem:[#allocation2 + $0x5]]
    %v161 = vstv %s160
    %vm162 = vcmp.ge.f32.partialorder %v155, %v161
    %v163 = vld [vmem:[#allocation9 + $0x3] sm:$0x1]
    %v164 = vld [vmem:[#allocation9 + $0x7] sm:$0x1]
    %v165 = vperm.slane %v164, 0
    %v166 = vperm.slane %v163, 0
    %v167 = vsel %vm159, %v165, %v166
    %v168 = vld [vmem:[#allocation9 + $0xb] sm:$0x1]
    %v169 = vperm.slane %v168, 0
    %v170 = vsel %vm162, %v169, %v167
    %v171 = vmul.f32 %v170, %v155
    %v172 = vld [vmem:[#allocation9 + $0x2] sm:$0x1]
    %v173 = vld [vmem:[#allocation9 + $0x6] sm:$0x1]
    %v174 = vperm.slane %v173, 0
    %v175 = vperm.slane %v172, 0
    %v176 = vsel %vm159, %v174, %v175
    %v177 = vld [vmem:[#allocation9 + $0xa] sm:$0x1]
    %v178 = vperm.slane %v177, 0
    %v179 = vsel %vm162, %v178, %v176
    %v180 = vadd.f32 %v171, %v179
    %v181 = vmul.f32 %v180, %v155
    %v182 = vld [vmem:[#allocation9 + $0x1] sm:$0x1]
    %v183 = vld [vmem:[#allocation9 + $0x5] sm:$0x1]
    %v184 = vperm.slane %v183, 0
    %v185 = vperm.slane %v182, 0
    %v186 = vsel %vm159, %v184, %v185
    %v187 = vld [vmem:[#allocation9 + $0x9] sm:$0x1]
    %v188 = vperm.slane %v187, 0
    %v189 = vsel %vm162, %v188, %v186
    %v190 = vadd.f32 %v181, %v189
    %v191 = vmul.f32 %v190, %v155
    %v192 = vld [vmem:[#allocation9] sm:$0x1]
    %v193 = vld [vmem:[#allocation9 + $0x4] sm:$0x1]
    %v194 = vperm.slane %v193, 0
    %v195 = vperm.slane %v192, 0
    %v196 = vsel %vm159, %v194, %v195
    %v197 = vld [vmem:[#allocation9 + $0x8] sm:$0x1]
    %v198 = vperm.slane %v197, 0
    %v199 = vsel %vm162, %v198, %v196
    %v200 = vadd.f32 %v191, %v199
    %201 = vst [vmem:[#allocation10] sm:$0xff] %v200
    // Predicated region
    $region38: #{tpu_custom_call.1} parent=1 // pred_check
      _
    $region39: #{tpu_custom_call.1} parent=1 // pred_check_branch
      %203 = sbr.rel (0) target = $region41
    $region40: #{tpu_custom_call.1} parent=1 // pred_region
      %205 = vsyncadd [#allocation4], 0
      %s207 = sshll.u32 [#allocation10], 4
      %s208 = int_to_ptr.vmem [resolvable:$true] %s207
      %s209 = sshll.u32 %s5, 4
      %s210 = int_to_ptr.hbm [resolvable:$true] %s209
      %212 = dma.vmem_to_hbm [thread:$0]  %s208, 128, %s210, [#allocation4]
    $region41: #{tpu_custom_call.1} parent=1 // pred_fallthru
      _
    // Predicated region
    $region42: #{tpu_custom_call.1} parent=1 // pred_check
      _
    $region43: #{tpu_custom_call.1} parent=1 // pred_check_branch
      %214 = sbr.rel (0) target = $region45
    $region44: #{tpu_custom_call.1} parent=1 // pred_region
      %216 = dma.done [#allocation4], 128
    $region45: #{tpu_custom_call.1} parent=1 // pred_fallthru
      _
    %217 = vsyncpa [#allocation3], 1
    %218 = vsyncpa [#allocation8], 1
    %219 = vsyncpa [#allocation4], 1
    %220 = vsyncpa [#allocation5], 1

</llo_original>
